<compile_context>
chip_gen: v7x
topology: tpu7x:2x2x1
jax: 0.10.0
libtpu: 0.0.40
codegen_flags: <defaults>
</compile_context>

<pallas_src>
import functools

import jax
import jax.numpy as jnp
import numpy as np
from jax.experimental import pallas as pl
from jax.experimental.pallas import tpu as pltpu


def _round_up(x, m):
    return (x + m - 1) // m * m


# ----------------------------- fused kernel -----------------------------------------------
def fused_conv_bn_film_relu_kernel(p_ref, w_ref, cp_ref, o_ref, conv_sc, stats_sc,
                                   *, inv_m, eps, tile_m, cout_p,
                                   tiles_per_image, num_tiles):
    """One grid step = one tile_m-row slab of the flattened (N*H*W) spatial dim.

    p_ref   : (tile_m, Kp)      im2col patches (lane-dense, K zero-padded to Kp)
    w_ref   : (Kp, Cp)          conv weights, resident across the grid
    cp_ref  : (8, Cp)           row0 = bn_w*gamma_eff, row1 = bn_b*gamma_eff + beta_eff
    o_ref   : (N, cout_p, H*W)  channel-major output, resident, written at the last step
    conv_sc : (num_tiles, tile_m, Cp) VMEM conv intermediate (never touches HBM)
    stats_sc: (16, Cp)          rows 0-7 partial sum, rows 8-15 partial sum of squares
    """
    t = pl.program_id(0)

    # ---- conv: one lane-dense MXU matmul per tile; result stays in VMEM ------------------
    acc = jnp.dot(p_ref[...], w_ref[...], preferred_element_type=jnp.float32)  # (tile_m, Cp)
    conv_sc[t] = acc

    # ---- accumulate BN partials as 8-row groups (pure VPU adds, no XLU per tile) ---------
    cp = acc.shape[-1]
    g = acc.reshape(tile_m // 8, 8, cp)
    psum = jnp.sum(g, axis=0)          # (8, Cp)
    psq = jnp.sum(g * g, axis=0)       # (8, Cp)

    @pl.when(t == 0)
    def _():
        stats_sc[...] = jnp.zeros_like(stats_sc)

    stats_sc[0:8, :] = stats_sc[0:8, :] + psum
    stats_sc[8:16, :] = stats_sc[8:16, :] + psq

    # ---- last step: finalize BN once, fold FiLM, apply scale/shift + ReLU, store ---------
    @pl.when(t == num_tiles - 1)
    def _():
        ssum = jnp.sum(stats_sc[0:8, :], axis=0, keepdims=True)    # (1, Cp)
        ssq = jnp.sum(stats_sc[8:16, :], axis=0, keepdims=True)    # (1, Cp)
        mean = ssum * inv_m
        var = jnp.maximum(ssq * inv_m - mean * mean, 0.0)          # biased batch variance
        inv_std = jax.lax.rsqrt(var + eps)

        cpv = cp_ref[...]
        scale = cpv[0:1, :] * inv_std                              # (1, Cp)
        shift = cpv[1:2, :] - mean * scale                         # (1, Cp)

        num_images = num_tiles // tiles_per_image
        # Static Python loops: num_tiles is a small compile-time constant at these sizes;
        # for large grids switch to lax.fori_loop over tiles.
        for n in range(num_images):
            for j in range(tiles_per_image):
                i = n * tiles_per_image + j
                y = jnp.maximum(conv_sc[i] * scale + shift, 0.0)   # (tile_m, Cp)  fused FMA+ReLU
                yt = jnp.transpose(y)                              # (Cp, tile_m)  XLU transpose
                # Store only the real channel rows (channel-major, lane-dense over spatial).
                o_ref[n, :, j * tile_m:(j + 1) * tile_m] = yt[0:cout_p, :]


# ----------------------------- wrapper ------------------------------------------------------
@functools.partial(jax.jit, static_argnames=("tile_m",))
def conv_task_forward(x_nchw, params, tile_m=None):
    conv_w = params["conv_w"].astype(jnp.float32)        # (Cout, Cin, 3, 3)
    Cout, Cin, _, _ = conv_w.shape
    N, _, H, W = x_nchw.shape
    HW = H * W
    M = N * HW

    if tile_m is None:                                   # largest per-image tile <= 512 rows
        tile_m = HW
        while tile_m > 512 and tile_m % 2 == 0:
            tile_m //= 2
    assert HW % tile_m == 0 and tile_m % 8 == 0, "tile_m must divide H*W and be a multiple of 8"
    tiles_per_image = HW // tile_m
    num_tiles = N * tiles_per_image

    # Tiny (1,T)@(T,C) task-pair FiLM projection + BN-affine folding (glue, stays in XLA).
    A = params["A_taskpair"].astype(jnp.float32)                         # (1, T)
    gamma_eff = (A @ params["gamma"].astype(jnp.float32).T).reshape(Cout)
    beta_eff = (A @ params["beta"].astype(jnp.float32).T).reshape(Cout)
    g1 = params["bn_w"].astype(jnp.float32) * gamma_eff
    g2 = params["bn_b"].astype(jnp.float32) * gamma_eff + beta_eff
    # conv bias dropped: training-mode BN subtracts the batch mean, so it cancels exactly.

    K = 9 * Cin
    Kp = _round_up(K, 128)           # lane-dense matmul K dim
    Cp = _round_up(Cout, 128)        # lane-dense MXU N dim (in-VMEM only; never stored padded)
    cout_p = _round_up(Cout, 8)      # channel rows actually stored (sublane granule)

    # im2col in the wrapper (lane-dense operands).  Zero-padded K columns contribute 0 to the
    # matmul, so results are exact.
    # TODO(synk): move im2col in-kernel (halo-tile DMA + shifted taps) to cut HBM reads to
    # ~1x the input and drop this XLA transpose/pad/concat chain.
    x = jnp.transpose(x_nchw, (0, 2, 3, 1)).astype(jnp.float32)          # NHWC
    xp = jnp.pad(x, ((0, 0), (1, 1), (1, 1), (0, 0)))
    patches = jnp.concatenate(
        [xp[:, dy:dy + H, dx:dx + W, :] for dy in range(3) for dx in range(3)],
        axis=-1).reshape(M, K)
    patches = jnp.pad(patches, ((0, 0), (0, Kp - K)))

    # OIHW -> HWIO -> (9*Cin, Cout), zero-padded to (Kp, Cp).
    w2d = jnp.transpose(conv_w, (2, 3, 1, 0)).reshape(K, Cout)
    w2d = jnp.pad(w2d, ((0, Kp - K), (0, Cp - Cout)))

    # Per-channel params packed into one lane-dense (8, Cp) block (padded lanes stay zero,
    # which keeps any padded output channels exactly zero).
    chan = jnp.zeros((8, Cp), jnp.float32)
    chan = chan.at[0, :Cout].set(g1)
    chan = chan.at[1, :Cout].set(g2)

    kern = functools.partial(
        fused_conv_bn_film_relu_kernel,
        inv_m=1.0 / float(M), eps=1e-5, tile_m=tile_m, cout_p=cout_p,
        tiles_per_image=tiles_per_image, num_tiles=num_tiles)

    out = pl.pallas_call(
        kern,
        out_shape=jax.ShapeDtypeStruct((N, cout_p, HW), jnp.float32),
        grid=(num_tiles,),
        in_specs=[
            pl.BlockSpec((tile_m, Kp), lambda t: (t, 0)),        # streamed patches
            pl.BlockSpec((Kp, Cp), lambda t: (0, 0)),            # weights, VMEM-resident
            pl.BlockSpec((8, Cp), lambda t: (0, 0)),             # folded channel params
        ],
        out_specs=pl.BlockSpec((N, cout_p, HW), lambda t: (0, 0, 0)),  # resident, one flush
        scratch_shapes=[
            pltpu.VMEM((num_tiles, tile_m, Cp), jnp.float32),    # conv intermediate (VMEM only)
            pltpu.VMEM((16, Cp), jnp.float32),                   # BN partial (sum, sumsq)
        ],
        compiler_params=pltpu.CompilerParams(
            # Running reduction + final apply -> sequential ("arbitrary") grid axis.
            # VMEM use is ~0.6 MiB here, well under the 16/32 MiB scoped defaults.
            dimension_semantics=("arbitrary",)),
    )(patches, w2d, chan)

    # Channel-major (N, cout_p, H*W) -> NCHW: pure slice + reshape, no XLA transpose pass.
    return out[:, :Cout, :].reshape(N, Cout, H, W)


# ----------------------------- pure-JAX reference (mirrors the PyTorch forward) -------------
def reference_forward(x_nchw, params):
    y = jax.lax.conv_general_dilated(
        x_nchw.astype(jnp.float32), params["conv_w"].astype(jnp.float32),
        window_strides=(1, 1), padding=((1, 1), (1, 1)),
        dimension_numbers=("NCHW", "OIHW", "NCHW"))
    y = y + params["conv_b"].reshape(1, -1, 1, 1)
    mean = jnp.mean(y, axis=(0, 2, 3), keepdims=True)
    var = jnp.mean((y - mean) ** 2, axis=(0, 2, 3), keepdims=True)
    yhat = (y - mean) / jnp.sqrt(var + 1e-5)
    y = yhat * params["bn_w"].reshape(1, -1, 1, 1) + params["bn_b"].reshape(1, -1, 1, 1)
    g = (params["A_taskpair"] @ params["gamma"].T).reshape(1, -1, 1, 1)
    b = (params["A_taskpair"] @ params["beta"].T).reshape(1, -1, 1, 1)
    return jnp.maximum(y * g + b, 0.0)


if __name__ == "__main__":
    batch, in_planes, planes, H, W = 2, 4, 8, 16, 16
    num_tasks = 2
    T = num_tasks * (num_tasks - 1)   # = 2

    key = jax.random.PRNGKey(0)
    kx, kw, kb, ka = jax.random.split(key, 4)

    x = jax.random.normal(kx, (batch, in_planes, H, W), dtype=jnp.float32)

    fan_in = in_planes * 3 * 3
    bound = 1.0 / np.sqrt(fan_in)
    params = {
        "conv_w": jax.random.uniform(kw, (planes, in_planes, 3, 3),
                                     minval=-bound, maxval=bound, dtype=jnp.float32),
        "conv_b": jax.random.uniform(kb, (planes,),
                                     minval=-bound, maxval=bound, dtype=jnp.float32),
        "gamma": jnp.ones((planes, T), dtype=jnp.float32),     # nn.Parameter(ones)
        "beta": jnp.zeros((planes, T), dtype=jnp.float32),     # nn.Parameter(zeros)
        "bn_w": jnp.ones((planes,), dtype=jnp.float32),        # BatchNorm2d affine defaults
        "bn_b": jnp.zeros((planes,), dtype=jnp.float32),
        # config_task.A_taskpair: external task-pair selector, (1, T)
        "A_taskpair": jax.random.uniform(ka, (1, T), dtype=jnp.float32),
    }

    out = jax.block_until_ready(conv_task_forward(x, params))
    ref = jax.block_until_ready(reference_forward(x, params))

    assert out.shape == (batch, planes, H, W)
    np.testing.assert_allclose(np.asarray(out), np.asarray(ref), rtol=1e-4, atol=1e-4)

    print("KERNEL_OK")
</pallas_src>

<mosaic_0001>
module attributes {stable_mosaic.version = 11 : i64} {
  func.func @fused_conv_bn_film_relu_kernel(%arg0: i32, %arg1: memref<256x128xf32, #tpu.memory_space<vmem>>, %arg2: memref<128x128xf32, #tpu.memory_space<vmem>>, %arg3: memref<8x128xf32, #tpu.memory_space<vmem>>, %arg4: memref<2x8x256xf32, #tpu.memory_space<vmem>>, %arg5: memref<2x256x128xf32, #tpu.memory_space<vmem>>, %arg6: memref<16x128xf32, #tpu.memory_space<vmem>>) attributes {dimension_semantics = [#tpu.dimension_semantics<arbitrary>], iteration_bounds = array<i64: 2>, scalar_prefetch = 0 : i64, scratch_operands = 2 : i64, tpu.core_type = #tpu.core_type<tc>, window_params = [{transform_indices = @transform_0, window_bounds = array<i64: 256, 128>}, {pipeline_mode = #tpu.pipeline_mode<synchronous>, transform_indices = @transform_1, window_bounds = array<i64: 128, 128>}, {pipeline_mode = #tpu.pipeline_mode<synchronous>, transform_indices = @transform_2, window_bounds = array<i64: 8, 128>}, {pipeline_mode = #tpu.pipeline_mode<synchronous>, transform_indices = @transform_3, window_bounds = array<i64: 2, 8, 256>}]} {
    %c0 = arith.constant 0 : index
    %c0_0 = arith.constant 0 : index
    %0 = vector.load %arg1[%c0, %c0_0] : memref<256x128xf32, #tpu.memory_space<vmem>>, vector<256x128xf32>
    %c0_1 = arith.constant 0 : index
    %c0_2 = arith.constant 0 : index
    %1 = vector.load %arg2[%c0_1, %c0_2] : memref<128x128xf32, #tpu.memory_space<vmem>>, vector<128x128xf32>
    %cst = arith.constant dense<0.000000e+00> : vector<256x128xf32>
    %2 = tpu.matmul %0, %1, %cst {dimension_numbers = #tpu.dot_dimension_numbers<[1], [0], [0], [1], [0, 0, 1, 1], [], []>} : vector<256x128xf32>, vector<128x128xf32>, vector<256x128xf32> -> vector<256x128xf32>
    %3 = arith.index_cast %arg0 : i32 to index
    %c0_3 = arith.constant 0 : index
    %c0_4 = arith.constant 0 : index
    %4 = vector.load %arg5[%3, %c0_3, %c0_4] : memref<2x256x128xf32, #tpu.memory_space<vmem>>, vector<1x256x128xf32>
    %5 = vector.shape_cast %4 : vector<1x256x128xf32> to vector<256x128xf32>
    %6 = vector.shape_cast %2 : vector<256x128xf32> to vector<1x256x128xf32>
    tpu.vector_store %arg5[%3, %c0_3, %c0_4], %6 {strides = array<i32>} : memref<2x256x128xf32, #tpu.memory_space<vmem>>, vector<1x256x128xf32>,
    %7 = vector.shape_cast %2 : vector<256x128xf32> to vector<32x8x128xf32>
    %cst_5 = arith.constant dense<0.000000e+00> : vector<8x128xf32>
    %8 = vector.multi_reduction <add>, %7, %cst_5 [0] : vector<32x8x128xf32> to vector<8x128xf32>
    %9 = arith.mulf %7, %7 : vector<32x8x128xf32>
    %cst_6 = arith.constant dense<0.000000e+00> : vector<8x128xf32>
    %10 = vector.multi_reduction <add>, %9, %cst_6 [0] : vector<32x8x128xf32> to vector<8x128xf32>
    %c0_i32 = arith.constant 0 : i32
    %11 = arith.cmpi eq, %arg0, %c0_i32 : i32
    %12 = arith.extui %11 : i1 to i32
    %c0_i32_7 = arith.constant 0 : i32
    %13 = arith.cmpi ne, %12, %c0_i32_7 : i32
    scf.if %13 {
      %cst_16 = arith.constant 0.000000e+00 : f32
      %23 = vector.broadcast %cst_16 : f32 to vector<16x128xf32>
      %c0_17 = arith.constant 0 : index
      %c0_18 = arith.constant 0 : index
      %24 = vector.load %arg6[%c0_17, %c0_18] : memref<16x128xf32, #tpu.memory_space<vmem>>, vector<16x128xf32>
      tpu.vector_store %arg6[%c0_17, %c0_18], %23 {strides = array<i32>} : memref<16x128xf32, #tpu.memory_space<vmem>>, vector<16x128xf32>,
    } else {
    }
    %c0_8 = arith.constant 0 : index
    %c0_9 = arith.constant 0 : index
    %14 = vector.load %arg6[%c0_8, %c0_9] : memref<16x128xf32, #tpu.memory_space<vmem>>, vector<8x128xf32>
    %15 = arith.addf %14, %8 : vector<8x128xf32>
    %c0_10 = arith.constant 0 : index
    %c0_11 = arith.constant 0 : index
    %16 = vector.load %arg6[%c0_10, %c0_11] : memref<16x128xf32, #tpu.memory_space<vmem>>, vector<8x128xf32>
    tpu.vector_store %arg6[%c0_10, %c0_11], %15 {strides = array<i32>} : memref<16x128xf32, #tpu.memory_space<vmem>>, vector<8x128xf32>,
    %c8 = arith.constant 8 : index
    %c0_12 = arith.constant 0 : index
    %17 = vector.load %arg6[%c8, %c0_12] : memref<16x128xf32, #tpu.memory_space<vmem>>, vector<8x128xf32>
    %18 = arith.addf %17, %10 : vector<8x128xf32>
    %c8_13 = arith.constant 8 : index
    %c0_14 = arith.constant 0 : index
    %19 = vector.load %arg6[%c8_13, %c0_14] : memref<16x128xf32, #tpu.memory_space<vmem>>, vector<8x128xf32>
    tpu.vector_store %arg6[%c8_13, %c0_14], %18 {strides = array<i32>} : memref<16x128xf32, #tpu.memory_space<vmem>>, vector<8x128xf32>,
    %c1_i32 = arith.constant 1 : i32
    %20 = arith.cmpi eq, %arg0, %c1_i32 : i32
    %21 = arith.extui %20 : i1 to i32
    %c0_i32_15 = arith.constant 0 : i32
    %22 = arith.cmpi ne, %21, %c0_i32_15 : i32
    scf.if %22 {
      %c0_16 = arith.constant 0 : index
      %c0_17 = arith.constant 0 : index
      %23 = vector.load %arg6[%c0_16, %c0_17] : memref<16x128xf32, #tpu.memory_space<vmem>>, vector<8x128xf32>
      %cst_18 = arith.constant dense<0.000000e+00> : vector<128xf32>
      %24 = vector.multi_reduction <add>, %23, %cst_18 [0] : vector<8x128xf32> to vector<128xf32>
      %25 = vector.shape_cast %24 : vector<128xf32> to vector<1x128xf32>
      %c8_19 = arith.constant 8 : index
      %c0_20 = arith.constant 0 : index
      %26 = vector.load %arg6[%c8_19, %c0_20] : memref<16x128xf32, #tpu.memory_space<vmem>>, vector<8x128xf32>
      %cst_21 = arith.constant dense<0.000000e+00> : vector<128xf32>
      %27 = vector.multi_reduction <add>, %26, %cst_21 [0] : vector<8x128xf32> to vector<128xf32>
      %28 = vector.shape_cast %27 : vector<128xf32> to vector<1x128xf32>
      %cst_22 = arith.constant 0.001953125 : f32
      %29 = vector.broadcast %cst_22 : f32 to vector<1x128xf32>
      %30 = arith.mulf %25, %29 : vector<1x128xf32>
      %cst_23 = arith.constant 0.001953125 : f32
      %31 = vector.broadcast %cst_23 : f32 to vector<1x128xf32>
      %32 = arith.mulf %28, %31 : vector<1x128xf32>
      %33 = arith.mulf %30, %30 : vector<1x128xf32>
      %34 = arith.subf %32, %33 : vector<1x128xf32>
      %cst_24 = arith.constant 0.000000e+00 : f32
      %35 = vector.broadcast %cst_24 : f32 to vector<1x128xf32>
      %36 = arith.maximumf %34, %35 : vector<1x128xf32>
      %cst_25 = arith.constant 9.99999974E-6 : f32
      %37 = vector.broadcast %cst_25 : f32 to vector<1x128xf32>
      %38 = arith.addf %36, %37 : vector<1x128xf32>
      %39 = math.rsqrt %38 : vector<1x128xf32>
      %c0_26 = arith.constant 0 : index
      %c0_27 = arith.constant 0 : index
      %40 = vector.load %arg3[%c0_26, %c0_27] : memref<8x128xf32, #tpu.memory_space<vmem>>, vector<8x128xf32>
      %41 = vector.extract_strided_slice %40 {offsets = [0, 0], sizes = [1, 128], strides = [1, 1]} : vector<8x128xf32> to vector<1x128xf32>
      %42 = arith.mulf %41, %39 : vector<1x128xf32>
      %43 = vector.extract_strided_slice %40 {offsets = [1, 0], sizes = [1, 128], strides = [1, 1]} : vector<8x128xf32> to vector<1x128xf32>
      %44 = arith.mulf %30, %42 : vector<1x128xf32>
      %45 = arith.subf %43, %44 : vector<1x128xf32>
      %c0_28 = arith.constant 0 : index
      %c0_29 = arith.constant 0 : index
      %c0_30 = arith.constant 0 : index
      %46 = vector.load %arg5[%c0_28, %c0_29, %c0_30] : memref<2x256x128xf32, #tpu.memory_space<vmem>>, vector<1x256x128xf32>
      %47 = vector.shape_cast %46 : vector<1x256x128xf32> to vector<256x128xf32>
      %48 = vector.broadcast %42 : vector<1x128xf32> to vector<256x128xf32>
      %49 = arith.mulf %47, %48 : vector<256x128xf32>
      %50 = vector.broadcast %45 : vector<1x128xf32> to vector<256x128xf32>
      %51 = arith.addf %49, %50 : vector<256x128xf32>
      %cst_31 = arith.constant 0.000000e+00 : f32
      %52 = vector.broadcast %cst_31 : f32 to vector<256x128xf32>
      %53 = arith.maximumf %51, %52 : vector<256x128xf32>
      %54 = tpu.transpose %53, [1, 0] : vector<256x128xf32> -> vector<128x256xf32>
      %55 = vector.extract_strided_slice %54 {offsets = [0, 0], sizes = [8, 256], strides = [1, 1]} : vector<128x256xf32> to vector<8x256xf32>
      %c0_32 = arith.constant 0 : index
      %c0_33 = arith.constant 0 : index
      %c0_34 = arith.constant 0 : index
      %56 = vector.load %arg4[%c0_32, %c0_33, %c0_34] : memref<2x8x256xf32, #tpu.memory_space<vmem>>, vector<1x8x256xf32>
      %57 = vector.shape_cast %56 : vector<1x8x256xf32> to vector<8x256xf32>
      %58 = vector.shape_cast %55 : vector<8x256xf32> to vector<1x8x256xf32>
      tpu.vector_store %arg4[%c0_32, %c0_33, %c0_34], %58 {strides = array<i32>} : memref<2x8x256xf32, #tpu.memory_space<vmem>>, vector<1x8x256xf32>,
      %c1 = arith.constant 1 : index
      %c0_35 = arith.constant 0 : index
      %c0_36 = arith.constant 0 : index
      %59 = vector.load %arg5[%c1, %c0_35, %c0_36] : memref<2x256x128xf32, #tpu.memory_space<vmem>>, vector<1x256x128xf32>
      %60 = vector.shape_cast %59 : vector<1x256x128xf32> to vector<256x128xf32>
      %61 = vector.broadcast %42 : vector<1x128xf32> to vector<256x128xf32>
      %62 = arith.mulf %60, %61 : vector<256x128xf32>
      %63 = vector.broadcast %45 : vector<1x128xf32> to vector<256x128xf32>
      %64 = arith.addf %62, %63 : vector<256x128xf32>
      %cst_37 = arith.constant 0.000000e+00 : f32
      %65 = vector.broadcast %cst_37 : f32 to vector<256x128xf32>
      %66 = arith.maximumf %64, %65 : vector<256x128xf32>
      %67 = tpu.transpose %66, [1, 0] : vector<256x128xf32> -> vector<128x256xf32>
      %68 = vector.extract_strided_slice %67 {offsets = [0, 0], sizes = [8, 256], strides = [1, 1]} : vector<128x256xf32> to vector<8x256xf32>
      %c1_38 = arith.constant 1 : index
      %c0_39 = arith.constant 0 : index
      %c0_40 = arith.constant 0 : index
      %69 = vector.load %arg4[%c1_38, %c0_39, %c0_40] : memref<2x8x256xf32, #tpu.memory_space<vmem>>, vector<1x8x256xf32>
      %70 = vector.shape_cast %69 : vector<1x8x256xf32> to vector<8x256xf32>
      %71 = vector.shape_cast %68 : vector<8x256xf32> to vector<1x8x256xf32>
      tpu.vector_store %arg4[%c1_38, %c0_39, %c0_40], %71 {strides = array<i32>} : memref<2x8x256xf32, #tpu.memory_space<vmem>>, vector<1x8x256xf32>,
    } else {
    }
    return
  }
  func.func @transform_0(%arg0: i32) -> (i32, i32) {
    %c0_i32 = arith.constant 0 : i32
    %c0_i32_0 = arith.constant 0 : i32
    return %arg0, %c0_i32 : i32, i32
  }
  func.func @transform_1(%arg0: i32) -> (i32, i32) {
    %c0_i32 = arith.constant 0 : i32
    %c0_i32_0 = arith.constant 0 : i32
    %c0_i32_1 = arith.constant 0 : i32
    return %c0_i32, %c0_i32_0 : i32, i32
  }
  func.func @transform_2(%arg0: i32) -> (i32, i32) {
    %c0_i32 = arith.constant 0 : i32
    %c0_i32_0 = arith.constant 0 : i32
    %c0_i32_1 = arith.constant 0 : i32
    return %c0_i32, %c0_i32_0 : i32, i32
  }
  func.func @transform_3(%arg0: i32) -> (i32, i32, i32) {
    %c0_i32 = arith.constant 0 : i32
    %c0_i32_0 = arith.constant 0 : i32
    %c0_i32_1 = arith.constant 0 : i32
    %c0_i32_2 = arith.constant 0 : i32
    return %c0_i32, %c0_i32_0, %c0_i32_1 : i32, i32, i32
  }
}

</mosaic_0001>

<llo_original>
// kernel: conv_task_forward.1
$region0: #{conv_task_forward.1}
  #allocation0 [shape = 'u32[]', space=smem, size = 0x4, offset = 0x4, fixed_abs, tag = 'smem constant byte address 0x4 - core index']
  #allocation1 [shape = 'u32[144,128]{1,0:T(1,128)}', space=vmem, size = 0x12000, scoped, tag = 'internal scratch']
  #allocation2 [shape = 'f32[2,256,128]{2,1,0:T(8,128)}', space=vmem, size = 0x40000, scoped, tag = 'scratch operand']
  #allocation3 [shape = 'f32[16,128]{1,0:T(8,128)}', space=vmem, size = 0x2000, scoped, tag = 'scratch operand']
  %s0 = inlined_call_operand.vmem [shape: f32[512,128], index: 0, kind: input, shape index: {}]
  %s1 = inlined_call_operand.vmem [shape: f32[128,128], index: 1, kind: input, shape index: {}]
  %s2 = inlined_call_operand.vmem [shape: f32[8,128], index: 2, kind: input, shape index: {}]
  %s3 = inlined_call_operand.vmem [shape: f32[2,8,256], index: 3, kind: output, shape index: {}]
  %s4 = sld [smem:[#allocation0]]
  $region53: #{conv_task_forward.1} parent=0
    _
  %s6 = ssub.s32 1, %s4
  %s7 = scalar_select 0, %s6, %s4
  loop: start=0, step=1, limit=4
  $region2: #{conv_task_forward.1} parent=0 // loop_pre_header
    _
  $region3: #{conv_task_forward.1} parent=0 // loop_header
    %s9 = sphi 0, %s13
    %p10 = scmp.ge.s32.totalorder %s9, 4
    %s19 = sphi 0, %s21
    %s22 = sphi 0, %s19
    %s23 = sphi 0, %s22
    %s39 = sphi 0, %s23
    %s43 = sphi 0, %s43
    %s45 = sphi 0, %s43
    %s46 = sphi 0, %s45
    %s60 = sphi 0, %s46
    %s64 = sphi 0, %s64
    %s66 = sphi 0, %s64
    %s67 = sphi 0, %s66
    %s81 = sphi 0, %s67
    %s85 = sphi 0, %s85
    %s87 = sphi 0, %s85
    %s88 = sphi 0, %s87
    %s102 = sphi 0, %s88
  $region4: #{conv_task_forward.1} parent=0 // loop_header_branch
    %12 = sbr.rel (%p10) target = $region8
  $region5: #{conv_task_forward.1} parent=0 // loop_body
    %s14 = ssub.s32 %s9, 1
    %s15 = ssub.s32 %s9, 2
    %s16 = sadd.s32 %s9, 1
    %s17 = ssub.s32 %s9, %s16
    %p18 = scmp.eq.s32.totalorder %s17, 0
    %s20 = sadd.s32 %s19, 1
    %s21 = scalar_select %p18, %s19, %s20
    %p24 = pneg %p18
    %p25 = scmp.eq.s32.totalorder %s9, 1
    %p26 = por %p24, %p25
    %p27 = scmp.ne.s32.totalorder %s19, %s22
    %p28 = scmp.eq.s32.totalorder %s9, 0
    %p29 = por %p27, %p28
    %p30 = scmp.ne.s32.totalorder %s19, %s22
    %p31 = scmp.eq.s32.totalorder %s14, 1
    %p32 = por %p30, %p31
    %p33 = scmp.ne.s32.totalorder %s22, %s23
    %p34 = scmp.eq.s32.totalorder %s14, 0
    %p35 = por %p33, %p34
    %p36 = scmp.ne.s32.totalorder %s22, %s23
    %p37 = scmp.eq.s32.totalorder %s15, 1
    %p38 = por %p36, %p37
    %p40 = scmp.ne.s32.totalorder %s23, %s39
    %p41 = scmp.eq.s32.totalorder %s15, 0
    %p42 = por %p40, %p41
    %s44 = sadd.s32 %s43, 1
    %p47 = scmp.eq.s32.totalorder %s9, 1
    %p48 = scmp.ne.s32.totalorder %s43, %s45
    %p49 = scmp.eq.s32.totalorder %s9, 0
    %p50 = por %p48, %p49
    %p51 = scmp.ne.s32.totalorder %s43, %s45
    %p52 = scmp.eq.s32.totalorder %s14, 1
    %p53 = por %p51, %p52
    %p54 = scmp.ne.s32.totalorder %s45, %s46
    %p55 = scmp.eq.s32.totalorder %s14, 0
    %p56 = por %p54, %p55
    %p57 = scmp.ne.s32.totalorder %s45, %s46
    %p58 = scmp.eq.s32.totalorder %s15, 1
    %p59 = por %p57, %p58
    %p61 = scmp.ne.s32.totalorder %s46, %s60
    %p62 = scmp.eq.s32.totalorder %s15, 0
    %p63 = por %p61, %p62
    %s65 = sadd.s32 %s64, 1
    %p68 = scmp.eq.s32.totalorder %s9, 1
    %p69 = scmp.ne.s32.totalorder %s64, %s66
    %p70 = scmp.eq.s32.totalorder %s9, 0
    %p71 = por %p69, %p70
    %p72 = scmp.ne.s32.totalorder %s64, %s66
    %p73 = scmp.eq.s32.totalorder %s14, 1
    %p74 = por %p72, %p73
    %p75 = scmp.ne.s32.totalorder %s66, %s67
    %p76 = scmp.eq.s32.totalorder %s14, 0
    %p77 = por %p75, %p76
    %p78 = scmp.ne.s32.totalorder %s66, %s67
    %p79 = scmp.eq.s32.totalorder %s15, 1
    %p80 = por %p78, %p79
    %p82 = scmp.ne.s32.totalorder %s67, %s81
    %p83 = scmp.eq.s32.totalorder %s15, 0
    %p84 = por %p82, %p83
    %s86 = sadd.s32 %s85, 1
    %p89 = scmp.eq.s32.totalorder %s9, 1
    %p90 = scmp.ne.s32.totalorder %s85, %s87
    %p91 = scmp.eq.s32.totalorder %s9, 0
    %p92 = por %p90, %p91
    %p93 = scmp.ne.s32.totalorder %s85, %s87
    %p94 = scmp.eq.s32.totalorder %s14, 1
    %p95 = por %p93, %p94
    %p96 = scmp.ne.s32.totalorder %s87, %s88
    %p97 = scmp.eq.s32.totalorder %s14, 0
    %p98 = por %p96, %p97
    %p99 = scmp.ne.s32.totalorder %s87, %s88
    %p100 = scmp.eq.s32.totalorder %s15, 1
    %p101 = por %p99, %p100
    %p103 = scmp.ne.s32.totalorder %s88, %s102
    %p104 = scmp.eq.s32.totalorder %s15, 0
    %p105 = por %p103, %p104
    %p106 = scmp.le.s32.totalorder 1, %s9
    %p107 = scmp.lt.s32.totalorder %s9, 3
    %p108 = pnand %p106, %p107
    %p109 = pneg %p108
    // Predicated region
    $region9: #{conv_task_forward.1} parent=5 // pred_check
      _
    $region10: #{conv_task_forward.1} parent=5 // pred_check_branch
      %111 = sbr.rel (%p108) target = $region12
    $region11: #{conv_task_forward.1} parent=5 // pred_region
      %s112 = ssub.s32 %s9, 1
      // Predicated region
      $region13: #{conv_task_forward.1} parent=11 // pred_check
        %p113 = pneg %p56
      $region14: #{conv_task_forward.1} parent=11 // pred_check_branch
        %115 = sbr.rel (%p113) target = $region16
      $region15: #{conv_task_forward.1} parent=11 // pred_region
        _
      $region16: #{conv_task_forward.1} parent=11 // pred_fallthru
        _
      // Predicated region
      $region17: #{conv_task_forward.1} parent=11 // pred_check
        %p116 = pneg %p77
      $region18: #{conv_task_forward.1} parent=11 // pred_check_branch
        %118 = sbr.rel (%p116) target = $region20
      $region19: #{conv_task_forward.1} parent=11 // pred_region
        _
      $region20: #{conv_task_forward.1} parent=11 // pred_fallthru
        _
    $region12: #{conv_task_forward.1} parent=5 // pred_fallthru
      _
    %p119 = scmp.lt.s32.totalorder %s9, 2
    // Predicated region
    $region21: #{conv_task_forward.1} parent=5 // pred_check
      %p120 = pneg %p119
    $region22: #{conv_task_forward.1} parent=5 // pred_check_branch
      %122 = sbr.rel (%p120) target = $region24
    $region23: #{conv_task_forward.1} parent=5 // pred_region
      // Predicated region
      $region25: #{conv_task_forward.1} parent=23 // pred_check
        %p123 = pneg %p29
      $region26: #{conv_task_forward.1} parent=23 // pred_check_branch
        %125 = sbr.rel (%p123) target = $region28
      $region27: #{conv_task_forward.1} parent=23 // pred_region
        %s126 = smul.u32 32, %s9
        %p127 = scmp.lt.s32.totalorder %s126, 63
        %s128 = scalar_select %p127, %s126, 63
        %s129 = smul.addr %s128, 8
        %s130 = scalar_lea.vmem %s0, %s129
        %s131 = smul.u32 32, %s9
      $region28: #{conv_task_forward.1} parent=23 // pred_fallthru
        _
    $region24: #{conv_task_forward.1} parent=5 // pred_fallthru
      _
    %p132 = scmp.le.s32.totalorder 1, %s9
    %p133 = scmp.lt.s32.totalorder %s9, 3
    %p134 = pnand %p132, %p133
    %p135 = pneg %p134
    // Predicated region
    $region29: #{conv_task_forward.1} parent=5 // pred_check
      _
    $region30: #{conv_task_forward.1} parent=5 // pred_check_branch
      %137 = sbr.rel (%p134) target = $region32
    $region31: #{conv_task_forward.1} parent=5 // pred_region
      %s138 = ssub.s32 %s9, 1
      %s139 = smul.u32 32, %s14
      %p140 = scmp.lt.s32.totalorder %s139, 63
      %s141 = scalar_select %p140, %s139, 63
      %s142 = smul.addr %s141, 8
      %s143 = scalar_lea.vmem %s0, %s142
      %p144 = pneg %p35
      %p145 = pneg %p32
      %p146 = pneg %p56
      %p147 = pneg %p53
      %p148 = pneg %p77
      %p149 = pneg %p74
      %p150 = pneg %p98
      %p151 = pneg %p95
      %s152 = smul.u32 32, %s14
      %p153 = scmp.lt.s32.totalorder %s152, 63
      %s154 = scalar_select %p153, %s152, 63
      %s155 = smul.addr %s154, 8
      %s156 = scalar_lea.vmem %s0, %s155
      %s157 = smul.u32 32, %s14
      %v158 = vld [vmem:[%s156] sm:$0xff]
      %v159 = vld [vmem:[%s156 + $0x8] sm:$0xff]
      %v160 = vld [vmem:[%s156 + $0x10] sm:$0xff]
      %v161 = vld [vmem:[%s156 + $0x18] sm:$0xff]
      %v162 = vld [vmem:[%s156 + $0x20] sm:$0xff]
      %v163 = vld [vmem:[%s156 + $0x28] sm:$0xff]
      %v164 = vld [vmem:[%s156 + $0x30] sm:$0xff]
      %v165 = vld [vmem:[%s156 + $0x38] sm:$0xff]
      %v166 = vld [vmem:[%s156 + $0x40] sm:$0xff]
      %v167 = vld [vmem:[%s156 + $0x48] sm:$0xff]
      %v168 = vld [vmem:[%s156 + $0x50] sm:$0xff]
      %v169 = vld [vmem:[%s156 + $0x58] sm:$0xff]
      %v170 = vld [vmem:[%s156 + $0x60] sm:$0xff]
      %v171 = vld [vmem:[%s156 + $0x68] sm:$0xff]
      %v172 = vld [vmem:[%s156 + $0x70] sm:$0xff]
      %v173 = vld [vmem:[%s156 + $0x78] sm:$0xff]
      %v174 = vld [vmem:[%s156 + $0x80] sm:$0xff]
      %v175 = vld [vmem:[%s156 + $0x88] sm:$0xff]
      %v176 = vld [vmem:[%s156 + $0x90] sm:$0xff]
      %v177 = vld [vmem:[%s156 + $0x98] sm:$0xff]
      %v178 = vld [vmem:[%s156 + $0xa0] sm:$0xff]
      %v179 = vld [vmem:[%s156 + $0xa8] sm:$0xff]
      %v180 = vld [vmem:[%s156 + $0xb0] sm:$0xff]
      %v181 = vld [vmem:[%s156 + $0xb8] sm:$0xff]
      %v182 = vld [vmem:[%s156 + $0xc0] sm:$0xff]
      %v183 = vld [vmem:[%s156 + $0xc8] sm:$0xff]
      %v184 = vld [vmem:[%s156 + $0xd0] sm:$0xff]
      %v185 = vld [vmem:[%s156 + $0xd8] sm:$0xff]
      %v186 = vld [vmem:[%s156 + $0xe0] sm:$0xff]
      %v187 = vld [vmem:[%s156 + $0xe8] sm:$0xff]
      %v188 = vld [vmem:[%s156 + $0xf0] sm:$0xff]
      %v189 = vld [vmem:[%s156 + $0xf8] sm:$0xff]
      %v190 = vld [vmem:[%s1] sm:$0xff]
      %v191 = vld [vmem:[%s1 + $0x8] sm:$0xff]
      %v192 = vld [vmem:[%s1 + $0x10] sm:$0xff]
      %v193 = vld [vmem:[%s1 + $0x18] sm:$0xff]
      %v194 = vld [vmem:[%s1 + $0x20] sm:$0xff]
      %v195 = vld [vmem:[%s1 + $0x28] sm:$0xff]
      %v196 = vld [vmem:[%s1 + $0x30] sm:$0xff]
      %v197 = vld [vmem:[%s1 + $0x38] sm:$0xff]
      %v198 = vld [vmem:[%s1 + $0x40] sm:$0xff]
      %v199 = vld [vmem:[%s1 + $0x48] sm:$0xff]
      %v200 = vld [vmem:[%s1 + $0x50] sm:$0xff]
      %v201 = vld [vmem:[%s1 + $0x58] sm:$0xff]
      %v202 = vld [vmem:[%s1 + $0x60] sm:$0xff]
      %v203 = vld [vmem:[%s1 + $0x68] sm:$0xff]
      %v204 = vld [vmem:[%s1 + $0x70] sm:$0xff]
      %v205 = vld [vmem:[%s1 + $0x78] sm:$0xff]
      %206 = vmatprep.subr.mxu0 0.0
      %207 = vmatpush1.msra.mxu0 %v190
      %208 = vmatprep.subr.mxu0 0.0
      %209 = vmatpush1.msra.mxu0 %v191
      %210 = vmatprep.subr.mxu0 0.0
      %211 = vmatpush1.msra.mxu0 %v192
      %212 = vmatprep.subr.mxu0 0.0
      %213 = vmatpush1.msra.mxu0 %v193
      %214 = vmatprep.subr.mxu0 0.0
      %215 = vmatpush1.msra.mxu0 %v194
      %216 = vmatprep.subr.mxu0 0.0
      %217 = vmatpush1.msra.mxu0 %v195
      %218 = vmatprep.subr.mxu0 0.0
      %219 = vmatpush1.msra.mxu0 %v196
      %220 = vmatprep.subr.mxu0 0.0
      %221 = vmatpush1.msra.mxu0 %v197
      %222 = vmatprep.subr.mxu0 0.0
      %223 = vmatpush1.msra.mxu0 %v198
      %224 = vmatprep.subr.mxu0 0.0
      %225 = vmatpush1.msra.mxu0 %v199
      %226 = vmatprep.subr.mxu0 0.0
      %227 = vmatpush1.msra.mxu0 %v200
      %228 = vmatprep.subr.mxu0 0.0
      %229 = vmatpush1.msra.mxu0 %v201
      %230 = vmatprep.subr.mxu0 0.0
      %231 = vmatpush1.msra.mxu0 %v202
      %232 = vmatprep.subr.mxu0 0.0
      %233 = vmatpush1.msra.mxu0 %v203
      %234 = vmatprep.subr.mxu0 0.0
      %235 = vmatpush1.msra.mxu0 %v204
      %236 = vmatprep.subr.mxu0 0.0
      %237 = vmatpush1.msra.mxu0 %v205
      %238 = vmatprep.subr.mxu0 0.0
      %239 = vmatpush1.msra.mxu0 0.0
      %240 = vmatprep.subr.mxu0 0.0
      %241 = vmatpush1.msra.mxu0 0.0
      %242 = vmatprep.subr.mxu0 0.0
      %243 = vmatpush1.msra.mxu0 0.0
      %244 = vmatprep.subr.mxu0 0.0
      %245 = vmatpush1.msra.mxu0 0.0
      %246 = vmatprep.subr.mxu0 0.0
      %247 = vmatpush1.msra.mxu0 0.0
      %248 = vmatprep.subr.mxu0 0.0
      %249 = vmatpush1.msra.mxu0 0.0
      %250 = vmatprep.subr.mxu0 0.0
      %251 = vmatpush1.msra.mxu0 0.0
      %252 = vmatprep.subr.mxu0 0.0
      %253 = vmatpush1.msra.mxu0 0.0
      %254 = vmatprep.subr.mxu0 0.0
      %255 = vmatpush1.msra.mxu0 0.0
      %256 = vmatprep.subr.mxu0 0.0
      %257 = vmatpush1.msra.mxu0 0.0
      %258 = vmatprep.subr.mxu0 0.0
      %259 = vmatpush1.msra.mxu0 0.0
      %260 = vmatprep.subr.mxu0 0.0
      %261 = vmatpush1.msra.mxu0 0.0
      %262 = vmatprep.subr.mxu0 0.0
      %263 = vmatpush1.msra.mxu0 0.0
      %264 = vmatprep.subr.mxu0 0.0
      %265 = vmatpush1.msra.mxu0 0.0
      %266 = vmatprep.subr.mxu0 0.0
      %267 = vmatpush1.msra.mxu0 0.0
      %268 = vmatprep.subr.mxu0 0.0
      %269 = vmatpush1.msra.mxu0 0.0
      %270 = vmatprep.mubr.f32.mxu0 0.0
      %271 = vmatmul.mubr.f32.gmra.mrb[0].mxu0 %v158
      %v272 = vpop.f32.mrb[0].mxu0
      %v273 = vadd.f32 0.0, %v272
      %v274 = vpop.f32.mrb[0].mxu0
      %275 = vmatprep.mubr.f32.mxu0 0.0
      %276 = vmatmul.mubr.f32.gmra.mrb[0].mxu0 %v159
      %v277 = vpop.f32.mrb[0].mxu0
      %v278 = vadd.f32 0.0, %v277
      %v279 = vpop.f32.mrb[0].mxu0
      %280 = vmatprep.mubr.f32.mxu0 0.0
      %281 = vmatmul.mubr.f32.gmra.mrb[0].mxu0 %v160
      %v282 = vpop.f32.mrb[0].mxu0
      %v283 = vadd.f32 0.0, %v282
      %v284 = vpop.f32.mrb[0].mxu0
      %285 = vmatprep.mubr.f32.mxu0 0.0
      %286 = vmatmul.mubr.f32.gmra.mrb[0].mxu0 %v161
      %v287 = vpop.f32.mrb[0].mxu0
      %v288 = vadd.f32 0.0, %v287
      %v289 = vpop.f32.mrb[0].mxu0
      %290 = vmatprep.mubr.f32.mxu0 0.0
      %291 = vmatmul.mubr.f32.gmra.mrb[0].mxu0 %v162
      %v292 = vpop.f32.mrb[0].mxu0
      %v293 = vadd.f32 0.0, %v292
      %v294 = vpop.f32.mrb[0].mxu0
      %295 = vmatprep.mubr.f32.mxu0 0.0
      %296 = vmatmul.mubr.f32.gmra.mrb[0].mxu0 %v163
      %v297 = vpop.f32.mrb[0].mxu0
      %v298 = vadd.f32 0.0, %v297
      %v299 = vpop.f32.mrb[0].mxu0
      %300 = vmatprep.mubr.f32.mxu0 0.0
      %301 = vmatmul.mubr.f32.gmra.mrb[0].mxu0 %v164
      %v302 = vpop.f32.mrb[0].mxu0
      %v303 = vadd.f32 0.0, %v302
      %v304 = vpop.f32.mrb[0].mxu0
      %305 = vmatprep.mubr.f32.mxu0 0.0
      %306 = vmatmul.mubr.f32.gmra.mrb[0].mxu0 %v165
      %v307 = vpop.f32.mrb[0].mxu0
      %v308 = vadd.f32 0.0, %v307
      %v309 = vpop.f32.mrb[0].mxu0
      %310 = vmatprep.mubr.f32.mxu0 0.0
      %311 = vmatmul.mubr.f32.gmra.mrb[0].mxu0 %v166
      %v312 = vpop.f32.mrb[0].mxu0
      %v313 = vadd.f32 0.0, %v312
      %v314 = vpop.f32.mrb[0].mxu0
      %315 = vmatprep.mubr.f32.mxu0 0.0
      %316 = vmatmul.mubr.f32.gmra.mrb[0].mxu0 %v167
      %v317 = vpop.f32.mrb[0].mxu0
      %v318 = vadd.f32 0.0, %v317
      %v319 = vpop.f32.mrb[0].mxu0
      %320 = vmatprep.mubr.f32.mxu0 0.0
      %321 = vmatmul.mubr.f32.gmra.mrb[0].mxu0 %v168
      %v322 = vpop.f32.mrb[0].mxu0
      %v323 = vadd.f32 0.0, %v322
      %v324 = vpop.f32.mrb[0].mxu0
      %325 = vmatprep.mubr.f32.mxu0 0.0
      %326 = vmatmul.mubr.f32.gmra.mrb[0].mxu0 %v169
      %v327 = vpop.f32.mrb[0].mxu0
      %v328 = vadd.f32 0.0, %v327
      %v329 = vpop.f32.mrb[0].mxu0
      %330 = vmatprep.mubr.f32.mxu0 0.0
      %331 = vmatmul.mubr.f32.gmra.mrb[0].mxu0 %v170
      %v332 = vpop.f32.mrb[0].mxu0
      %v333 = vadd.f32 0.0, %v332
      %v334 = vpop.f32.mrb[0].mxu0
      %335 = vmatprep.mubr.f32.mxu0 0.0
      %336 = vmatmul.mubr.f32.gmra.mrb[0].mxu0 %v171
      %v337 = vpop.f32.mrb[0].mxu0
      %v338 = vadd.f32 0.0, %v337
      %v339 = vpop.f32.mrb[0].mxu0
      %340 = vmatprep.mubr.f32.mxu0 0.0
      %341 = vmatmul.mubr.f32.gmra.mrb[0].mxu0 %v172
      %v342 = vpop.f32.mrb[0].mxu0
      %v343 = vadd.f32 0.0, %v342
      %v344 = vpop.f32.mrb[0].mxu0
      %345 = vmatprep.mubr.f32.mxu0 0.0
      %346 = vmatmul.mubr.f32.gmra.mrb[0].mxu0 %v173
      %v347 = vpop.f32.mrb[0].mxu0
      %v348 = vadd.f32 0.0, %v347
      %v349 = vpop.f32.mrb[0].mxu0
      %350 = vmatprep.mubr.f32.mxu0 0.0
      %351 = vmatmul.mubr.f32.gmra.mrb[0].mxu0 %v174
      %v352 = vpop.f32.mrb[0].mxu0
      %v353 = vadd.f32 0.0, %v352
      %v354 = vpop.f32.mrb[0].mxu0
      %355 = vmatprep.mubr.f32.mxu0 0.0
      %356 = vmatmul.mubr.f32.gmra.mrb[0].mxu0 %v175
      %v357 = vpop.f32.mrb[0].mxu0
      %v358 = vadd.f32 0.0, %v357
      %v359 = vpop.f32.mrb[0].mxu0
      %360 = vmatprep.mubr.f32.mxu0 0.0
      %361 = vmatmul.mubr.f32.gmra.mrb[0].mxu0 %v176
      %v362 = vpop.f32.mrb[0].mxu0
      %v363 = vadd.f32 0.0, %v362
      %v364 = vpop.f32.mrb[0].mxu0
      %365 = vmatprep.mubr.f32.mxu0 0.0
      %366 = vmatmul.mubr.f32.gmra.mrb[0].mxu0 %v177
      %v367 = vpop.f32.mrb[0].mxu0
      %v368 = vadd.f32 0.0, %v367
      %v369 = vpop.f32.mrb[0].mxu0
      %370 = vmatprep.mubr.f32.mxu0 0.0
      %371 = vmatmul.mubr.f32.gmra.mrb[0].mxu0 %v178
      %v372 = vpop.f32.mrb[0].mxu0
      %v373 = vadd.f32 0.0, %v372
      %v374 = vpop.f32.mrb[0].mxu0
      %375 = vmatprep.mubr.f32.mxu0 0.0
      %376 = vmatmul.mubr.f32.gmra.mrb[0].mxu0 %v179
      %v377 = vpop.f32.mrb[0].mxu0
      %v378 = vadd.f32 0.0, %v377
      %v379 = vpop.f32.mrb[0].mxu0
      %380 = vmatprep.mubr.f32.mxu0 0.0
      %381 = vmatmul.mubr.f32.gmra.mrb[0].mxu0 %v180
      %v382 = vpop.f32.mrb[0].mxu0
      %v383 = vadd.f32 0.0, %v382
      %v384 = vpop.f32.mrb[0].mxu0
      %385 = vmatprep.mubr.f32.mxu0 0.0
      %386 = vmatmul.mubr.f32.gmra.mrb[0].mxu0 %v181
      %v387 = vpop.f32.mrb[0].mxu0
      %v388 = vadd.f32 0.0, %v387
      %v389 = vpop.f32.mrb[0].mxu0
      %390 = vmatprep.mubr.f32.mxu0 0.0
      %391 = vmatmul.mubr.f32.gmra.mrb[0].mxu0 %v182
      %v392 = vpop.f32.mrb[0].mxu0
      %v393 = vadd.f32 0.0, %v392
      %v394 = vpop.f32.mrb[0].mxu0
      %395 = vmatprep.mubr.f32.mxu0 0.0
      %396 = vmatmul.mubr.f32.gmra.mrb[0].mxu0 %v183
      %v397 = vpop.f32.mrb[0].mxu0
      %v398 = vadd.f32 0.0, %v397
      %v399 = vpop.f32.mrb[0].mxu0
      %400 = vmatprep.mubr.f32.mxu0 0.0
      %401 = vmatmul.mubr.f32.gmra.mrb[0].mxu0 %v184
      %v402 = vpop.f32.mrb[0].mxu0
      %v403 = vadd.f32 0.0, %v402
      %v404 = vpop.f32.mrb[0].mxu0
      %405 = vmatprep.mubr.f32.mxu0 0.0
      %406 = vmatmul.mubr.f32.gmra.mrb[0].mxu0 %v185
      %v407 = vpop.f32.mrb[0].mxu0
      %v408 = vadd.f32 0.0, %v407
      %v409 = vpop.f32.mrb[0].mxu0
      %410 = vmatprep.mubr.f32.mxu0 0.0
      %411 = vmatmul.mubr.f32.gmra.mrb[0].mxu0 %v186
      %v412 = vpop.f32.mrb[0].mxu0
      %v413 = vadd.f32 0.0, %v412
      %v414 = vpop.f32.mrb[0].mxu0
      %415 = vmatprep.mubr.f32.mxu0 0.0
      %416 = vmatmul.mubr.f32.gmra.mrb[0].mxu0 %v187
      %v417 = vpop.f32.mrb[0].mxu0
      %v418 = vadd.f32 0.0, %v417
      %v419 = vpop.f32.mrb[0].mxu0
      %420 = vmatprep.mubr.f32.mxu0 0.0
      %421 = vmatmul.mubr.f32.gmra.mrb[0].mxu0 %v188
      %v422 = vpop.f32.mrb[0].mxu0
      %v423 = vadd.f32 0.0, %v422
      %v424 = vpop.f32.mrb[0].mxu0
      %425 = vmatprep.mubr.f32.mxu0 0.0
      %426 = vmatmul.mubr.f32.gmra.mrb[0].mxu0 %v189
      %v427 = vpop.f32.mrb[0].mxu0
      %v428 = vadd.f32 0.0, %v427
      %v429 = vpop.f32.mrb[0].mxu0
      %430 = vdwg.mxu0
      %s431 = smul.u32 %s14, 256
      %s432 = scalar_lea.vmem [#allocation2], %s431
      %433 = vst [vmem:[%s432] sm:$0xff] %v273
      %434 = vst [vmem:[%s432 + $0x8] sm:$0xff] %v278
      %435 = vst [vmem:[%s432 + $0x10] sm:$0xff] %v283
      %436 = vst [vmem:[%s432 + $0x18] sm:$0xff] %v288
      %437 = vst [vmem:[%s432 + $0x20] sm:$0xff] %v293
      %438 = vst [vmem:[%s432 + $0x28] sm:$0xff] %v298
      %439 = vst [vmem:[%s432 + $0x30] sm:$0xff] %v303
      %440 = vst [vmem:[%s432 + $0x38] sm:$0xff] %v308
      %441 = vst [vmem:[%s432 + $0x40] sm:$0xff] %v313
      %442 = vst [vmem:[%s432 + $0x48] sm:$0xff] %v318
      %443 = vst [vmem:[%s432 + $0x50] sm:$0xff] %v323
      %444 = vst [vmem:[%s432 + $0x58] sm:$0xff] %v328
      %445 = vst [vmem:[%s432 + $0x60] sm:$0xff] %v333
      %446 = vst [vmem:[%s432 + $0x68] sm:$0xff] %v338
      %447 = vst [vmem:[%s432 + $0x70] sm:$0xff] %v343
      %448 = vst [vmem:[%s432 + $0x78] sm:$0xff] %v348
      %449 = vst [vmem:[%s432 + $0x80] sm:$0xff] %v353
      %450 = vst [vmem:[%s432 + $0x88] sm:$0xff] %v358
      %451 = vst [vmem:[%s432 + $0x90] sm:$0xff] %v363
      %452 = vst [vmem:[%s432 + $0x98] sm:$0xff] %v368
      %453 = vst [vmem:[%s432 + $0xa0] sm:$0xff] %v373
      %454 = vst [vmem:[%s432 + $0xa8] sm:$0xff] %v378
      %455 = vst [vmem:[%s432 + $0xb0] sm:$0xff] %v383
      %456 = vst [vmem:[%s432 + $0xb8] sm:$0xff] %v388
      %457 = vst [vmem:[%s432 + $0xc0] sm:$0xff] %v393
      %458 = vst [vmem:[%s432 + $0xc8] sm:$0xff] %v398
      %459 = vst [vmem:[%s432 + $0xd0] sm:$0xff] %v403
      %460 = vst [vmem:[%s432 + $0xd8] sm:$0xff] %v408
      %461 = vst [vmem:[%s432 + $0xe0] sm:$0xff] %v413
      %462 = vst [vmem:[%s432 + $0xe8] sm:$0xff] %v418
      %463 = vst [vmem:[%s432 + $0xf0] sm:$0xff] %v423
      %464 = vst [vmem:[%s432 + $0xf8] sm:$0xff] %v428
      %v465 = vadd.f32 %v273, %v278
      %v466 = vadd.f32 %v465, %v283
      %v467 = vadd.f32 %v466, %v288
      %v468 = vadd.f32 %v467, %v293
      %v469 = vadd.f32 %v468, %v298
      %v470 = vadd.f32 %v469, %v303
      %v471 = vadd.f32 %v470, %v308
      %v472 = vadd.f32 %v471, %v313
      %v473 = vadd.f32 %v472, %v318
      %v474 = vadd.f32 %v473, %v323
      %v475 = vadd.f32 %v474, %v328
      %v476 = vadd.f32 %v475, %v333
      %v477 = vadd.f32 %v476, %v338
      %v478 = vadd.f32 %v477, %v343
      %v479 = vadd.f32 %v478, %v348
      %v480 = vadd.f32 %v479, %v353
      %v481 = vadd.f32 %v480, %v358
      %v482 = vadd.f32 %v481, %v363
      %v483 = vadd.f32 %v482, %v368
      %v484 = vadd.f32 %v483, %v373
      %v485 = vadd.f32 %v484, %v378
      %v486 = vadd.f32 %v485, %v383
      %v487 = vadd.f32 %v486, %v388
      %v488 = vadd.f32 %v487, %v393
      %v489 = vadd.f32 %v488, %v398
      %v490 = vadd.f32 %v489, %v403
      %v491 = vadd.f32 %v490, %v408
      %v492 = vadd.f32 %v491, %v413
      %v493 = vadd.f32 %v492, %v418
      %v494 = vadd.f32 %v493, %v423
      %v495 = vadd.f32 %v494, %v428
      %v496 = vmul.f32 %v273, %v273
      %v497 = vmul.f32 %v278, %v278
      %v498 = vmul.f32 %v283, %v283
      %v499 = vmul.f32 %v288, %v288
      %v500 = vmul.f32 %v293, %v293
      %v501 = vmul.f32 %v298, %v298
      %v502 = vmul.f32 %v303, %v303
      %v503 = vmul.f32 %v308, %v308
      %v504 = vmul.f32 %v313, %v313
      %v505 = vmul.f32 %v318, %v318
      %v506 = vmul.f32 %v323, %v323
      %v507 = vmul.f32 %v328, %v328
      %v508 = vmul.f32 %v333, %v333
      %v509 = vmul.f32 %v338, %v338
      %v510 = vmul.f32 %v343, %v343
      %v511 = vmul.f32 %v348, %v348
      %v512 = vmul.f32 %v353, %v353
      %v513 = vmul.f32 %v358, %v358
      %v514 = vmul.f32 %v363, %v363
      %v515 = vmul.f32 %v368, %v368
      %v516 = vmul.f32 %v373, %v373
      %v517 = vmul.f32 %v378, %v378
      %v518 = vmul.f32 %v383, %v383
      %v519 = vmul.f32 %v388, %v388
      %v520 = vmul.f32 %v393, %v393
      %v521 = vmul.f32 %v398, %v398
      %v522 = vmul.f32 %v403, %v403
      %v523 = vmul.f32 %v408, %v408
      %v524 = vmul.f32 %v413, %v413
      %v525 = vmul.f32 %v418, %v418
      %v526 = vmul.f32 %v423, %v423
      %v527 = vmul.f32 %v428, %v428
      %v528 = vadd.f32 %v496, %v497
      %v529 = vadd.f32 %v528, %v498
      %v530 = vadd.f32 %v529, %v499
      %v531 = vadd.f32 %v530, %v500
      %v532 = vadd.f32 %v531, %v501
      %v533 = vadd.f32 %v532, %v502
      %v534 = vadd.f32 %v533, %v503
      %v535 = vadd.f32 %v534, %v504
      %v536 = vadd.f32 %v535, %v505
      %v537 = vadd.f32 %v536, %v506
      %v538 = vadd.f32 %v537, %v507
      %v539 = vadd.f32 %v538, %v508
      %v540 = vadd.f32 %v539, %v509
      %v541 = vadd.f32 %v540, %v510
      %v542 = vadd.f32 %v541, %v511
      %v543 = vadd.f32 %v542, %v512
      %v544 = vadd.f32 %v543, %v513
      %v545 = vadd.f32 %v544, %v514
      %v546 = vadd.f32 %v545, %v515
      %v547 = vadd.f32 %v546, %v516
      %v548 = vadd.f32 %v547, %v517
      %v549 = vadd.f32 %v548, %v518
      %v550 = vadd.f32 %v549, %v519
      %v551 = vadd.f32 %v550, %v520
      %v552 = vadd.f32 %v551, %v521
      %v553 = vadd.f32 %v552, %v522
      %v554 = vadd.f32 %v553, %v523
      %v555 = vadd.f32 %v554, %v524
      %v556 = vadd.f32 %v555, %v525
      %v557 = vadd.f32 %v556, %v526
      %v558 = vadd.f32 %v557, %v527
      %p559 = scmp.eq.s32.totalorder %s14, 0
      // Predicated region
      $region33: #{conv_task_forward.1} parent=31 // pred_check
        %p560 = pneg %p559
      $region34: #{conv_task_forward.1} parent=31 // pred_check_branch
        %562 = sbr.rel (%p560) target = $region36
      $region35: #{conv_task_forward.1} parent=31 // pred_region
        %563 = vst [vmem:[#allocation3] sm:$0xff] 0.0
        %564 = vst [vmem:[#allocation3 + $0x8] sm:$0xff] 0.0
      $region36: #{conv_task_forward.1} parent=31 // pred_fallthru
        _
      %v565 = vld [vmem:[#allocation3] sm:$0xff]
      %v566 = vadd.f32 %v565, %v495
      %567 = vst [vmem:[#allocation3] sm:$0xff] %v566
      %v568 = vld [vmem:[#allocation3 + $0x8] sm:$0xff]
      %v569 = vadd.f32 %v568, %v558
      %570 = vst [vmem:[#allocation3 + $0x8] sm:$0xff] %v569
      %p571 = scmp.eq.s32.totalorder %s14, 1
      // Predicated region
      $region37: #{conv_task_forward.1} parent=31 // pred_check
        %p572 = pneg %p571
      $region38: #{conv_task_forward.1} parent=31 // pred_check_branch
        %574 = sbr.rel (%p572) target = $region40
      $region39: #{conv_task_forward.1} parent=31 // pred_region
        %v575 = vld [vmem:[#allocation3] sm:$0xff]
        %v576 = vrot.slane %v575, 4
        %v577 = vadd.f32 %v575, %v576
        %v578 = vrot.slane %v577, 2
        %v579 = vadd.f32 %v577, %v578
        %v580 = vrot.slane %v579, 1
        %v581 = vadd.f32 %v579, %v580
        %v582 = vld [vmem:[#allocation3 + $0x8] sm:$0xff]
        %v583 = vrot.slane %v582, 4
        %v584 = vadd.f32 %v582, %v583
        %v585 = vrot.slane %v584, 2
        %v586 = vadd.f32 %v584, %v585
        %v587 = vrot.slane %v586, 1
        %v588 = vadd.f32 %v586, %v587
        %v589 = vmul.f32 %v581, 0.001953125
        %v590 = vmul.f32 %v588, 0.001953125
        %v591 = vmul.f32 %v589, %v589
        %v592 = vsub.f32 %v590, %v591
        %v593 = vmax.f32 %v592, 0.0
        %v594 = vadd.f32 %v593, 1e-05
        %v595 = vrsqrt.pop %v594
        %v596 = vld [vmem:[%s2] sm:$0xff]
        %v597 = vmul.f32 %v596, %v595
        %v598 = vmul.f32 %v589, %v597
        %v600 = vrot.slane %v598, 7
        %v602 = vsub.f32 %v596, %v600
        %v603 = vld [vmem:[#allocation2] sm:$0xff]
        %v604 = vld [vmem:[#allocation2 + $0x8] sm:$0xff]
        %v605 = vld [vmem:[#allocation2 + $0x10] sm:$0xff]
        %v606 = vld [vmem:[#allocation2 + $0x18] sm:$0xff]
        %v607 = vld [vmem:[#allocation2 + $0x20] sm:$0xff]
        %v608 = vld [vmem:[#allocation2 + $0x28] sm:$0xff]
        %v609 = vld [vmem:[#allocation2 + $0x30] sm:$0xff]
        %v610 = vld [vmem:[#allocation2 + $0x38] sm:$0xff]
        %v611 = vld [vmem:[#allocation2 + $0x40] sm:$0xff]
        %v612 = vld [vmem:[#allocation2 + $0x48] sm:$0xff]
        %v613 = vld [vmem:[#allocation2 + $0x50] sm:$0xff]
        %v614 = vld [vmem:[#allocation2 + $0x58] sm:$0xff]
        %v615 = vld [vmem:[#allocation2 + $0x60] sm:$0xff]
        %v616 = vld [vmem:[#allocation2 + $0x68] sm:$0xff]
        %v617 = vld [vmem:[#allocation2 + $0x70] sm:$0xff]
        %v618 = vld [vmem:[#allocation2 + $0x78] sm:$0xff]
        %v619 = vld [vmem:[#allocation2 + $0x80] sm:$0xff]
        %v620 = vld [vmem:[#allocation2 + $0x88] sm:$0xff]
        %v621 = vld [vmem:[#allocation2 + $0x90] sm:$0xff]
        %v622 = vld [vmem:[#allocation2 + $0x98] sm:$0xff]
        %v623 = vld [vmem:[#allocation2 + $0xa0] sm:$0xff]
        %v624 = vld [vmem:[#allocation2 + $0xa8] sm:$0xff]
        %v625 = vld [vmem:[#allocation2 + $0xb0] sm:$0xff]
        %v626 = vld [vmem:[#allocation2 + $0xb8] sm:$0xff]
        %v627 = vld [vmem:[#allocation2 + $0xc0] sm:$0xff]
        %v628 = vld [vmem:[#allocation2 + $0xc8] sm:$0xff]
        %v629 = vld [vmem:[#allocation2 + $0xd0] sm:$0xff]
        %v630 = vld [vmem:[#allocation2 + $0xd8] sm:$0xff]
        %v631 = vld [vmem:[#allocation2 + $0xe0] sm:$0xff]
        %v632 = vld [vmem:[#allocation2 + $0xe8] sm:$0xff]
        %v633 = vld [vmem:[#allocation2 + $0xf0] sm:$0xff]
        %v634 = vld [vmem:[#allocation2 + $0xf8] sm:$0xff]
        %v635 = vlaneseq
        %v636 = vshrl.u32 %v635, 7
        %v637 = vsub.s32 0, %v636
        %v638 = vrot.slane %v597, %v637
        %v639 = vmul.f32 %v603, %v638
        %v640 = vmul.f32 %v604, %v638
        %v641 = vmul.f32 %v605, %v638
        %v642 = vmul.f32 %v606, %v638
        %v643 = vmul.f32 %v607, %v638
        %v644 = vmul.f32 %v608, %v638
        %v645 = vmul.f32 %v609, %v638
        %v646 = vmul.f32 %v610, %v638
        %v647 = vmul.f32 %v611, %v638
        %v648 = vmul.f32 %v612, %v638
        %v649 = vmul.f32 %v613, %v638
        %v650 = vmul.f32 %v614, %v638
        %v651 = vmul.f32 %v615, %v638
        %v652 = vmul.f32 %v616, %v638
        %v653 = vmul.f32 %v617, %v638
        %v654 = vmul.f32 %v618, %v638
        %v655 = vmul.f32 %v619, %v638
        %v656 = vmul.f32 %v620, %v638
        %v657 = vmul.f32 %v621, %v638
        %v658 = vmul.f32 %v622, %v638
        %v659 = vmul.f32 %v623, %v638
        %v660 = vmul.f32 %v624, %v638
        %v661 = vmul.f32 %v625, %v638
        %v662 = vmul.f32 %v626, %v638
        %v663 = vmul.f32 %v627, %v638
        %v664 = vmul.f32 %v628, %v638
        %v665 = vmul.f32 %v629, %v638
        %v666 = vmul.f32 %v630, %v638
        %v667 = vmul.f32 %v631, %v638
        %v668 = vmul.f32 %v632, %v638
        %v669 = vmul.f32 %v633, %v638
        %v670 = vmul.f32 %v634, %v638
        %v671 = vlaneseq
        %v672 = vshrl.u32 %v671, 7
        %v673 = vsub.s32 1, %v672
        %v674 = vrot.slane %v602, %v673
        %v675 = vadd.f32 %v639, %v674
        %v676 = vadd.f32 %v640, %v674
        %v677 = vadd.f32 %v641, %v674
        %v678 = vadd.f32 %v642, %v674
        %v679 = vadd.f32 %v643, %v674
        %v680 = vadd.f32 %v644, %v674
        %v681 = vadd.f32 %v645, %v674
        %v682 = vadd.f32 %v646, %v674
        %v683 = vadd.f32 %v647, %v674
        %v684 = vadd.f32 %v648, %v674
        %v685 = vadd.f32 %v649, %v674
        %v686 = vadd.f32 %v650, %v674
        %v687 = vadd.f32 %v651, %v674
        %v688 = vadd.f32 %v652, %v674
        %v689 = vadd.f32 %v653, %v674
        %v690 = vadd.f32 %v654, %v674
        %v691 = vadd.f32 %v655, %v674
        %v692 = vadd.f32 %v656, %v674
        %v693 = vadd.f32 %v657, %v674
        %v694 = vadd.f32 %v658, %v674
        %v695 = vadd.f32 %v659, %v674
        %v696 = vadd.f32 %v660, %v674
        %v697 = vadd.f32 %v661, %v674
        %v698 = vadd.f32 %v662, %v674
        %v699 = vadd.f32 %v663, %v674
        %v700 = vadd.f32 %v664, %v674
        %v701 = vadd.f32 %v665, %v674
        %v702 = vadd.f32 %v666, %v674
        %v703 = vadd.f32 %v667, %v674
        %v704 = vadd.f32 %v668, %v674
        %v705 = vadd.f32 %v669, %v674
        %v706 = vadd.f32 %v670, %v674
        %v707 = vmax.f32 %v675, 0.0
        %v708 = vmax.f32 %v676, 0.0
        %v709 = vmax.f32 %v677, 0.0
        %v710 = vmax.f32 %v678, 0.0
        %v711 = vmax.f32 %v679, 0.0
        %v712 = vmax.f32 %v680, 0.0
        %v713 = vmax.f32 %v681, 0.0
        %v714 = vmax.f32 %v682, 0.0
        %v715 = vmax.f32 %v683, 0.0
        %v716 = vmax.f32 %v684, 0.0
        %v717 = vmax.f32 %v685, 0.0
        %v718 = vmax.f32 %v686, 0.0
        %v719 = vmax.f32 %v687, 0.0
        %v720 = vmax.f32 %v688, 0.0
        %v721 = vmax.f32 %v689, 0.0
        %v722 = vmax.f32 %v690, 0.0
        %v723 = vmax.f32 %v691, 0.0
        %v724 = vmax.f32 %v692, 0.0
        %v725 = vmax.f32 %v693, 0.0
        %v726 = vmax.f32 %v694, 0.0
        %v727 = vmax.f32 %v695, 0.0
        %v728 = vmax.f32 %v696, 0.0
        %v729 = vmax.f32 %v697, 0.0
        %v730 = vmax.f32 %v698, 0.0
        %v731 = vmax.f32 %v699, 0.0
        %v732 = vmax.f32 %v700, 0.0
        %v733 = vmax.f32 %v701, 0.0
        %v734 = vmax.f32 %v702, 0.0
        %v735 = vmax.f32 %v703, 0.0
        %v736 = vmax.f32 %v704, 0.0
        %v737 = vmax.f32 %v705, 0.0
        %v738 = vmax.f32 %v706, 0.0
        %739 = vxpose.xlu0.b32.start [1/16] %v707, 128
        %740 = vxpose.xlu0.b32.cont [2/16] %v708, 128
        %741 = vxpose.xlu0.b32.cont [3/16] %v709, 128
        %742 = vxpose.xlu0.b32.cont [4/16] %v710, 128
        %743 = vxpose.xlu0.b32.cont [5/16] %v711, 128
        %744 = vxpose.xlu0.b32.cont [6/16] %v712, 128
        %745 = vxpose.xlu0.b32.cont [7/16] %v713, 128
        %746 = vxpose.xlu0.b32.cont [8/16] %v714, 128
        %747 = vxpose.xlu0.b32.cont [9/16] %v715, 128
        %748 = vxpose.xlu0.b32.cont [10/16] %v716, 128
        %749 = vxpose.xlu0.b32.cont [11/16] %v717, 128
        %750 = vxpose.xlu0.b32.cont [12/16] %v718, 128
        %751 = vxpose.xlu0.b32.cont [13/16] %v719, 128
        %752 = vxpose.xlu0.b32.cont [14/16] %v720, 128
        %753 = vxpose.xlu0.b32.cont [15/16] %v721, 128
        %754 = vxpose.xlu0.b32.end [16/16] %v722, 128
        %v755 = vpop.trf.xlu0
        %v756 = vpop.trf.xlu0
        %v757 = vpop.trf.xlu0
        %v758 = vpop.trf.xlu0
        %v759 = vpop.trf.xlu0
        %v760 = vpop.trf.xlu0
        %v761 = vpop.trf.xlu0
        %v762 = vpop.trf.xlu0
        %v763 = vpop.trf.xlu0
        %v764 = vpop.trf.xlu0
        %v765 = vpop.trf.xlu0
        %v766 = vpop.trf.xlu0
        %v767 = vpop.trf.xlu0
        %v768 = vpop.trf.xlu0
        %v769 = vpop.trf.xlu0
        %v770 = vpop.trf.xlu0
        %771 = vxpose.xlu0.b32.start [1/16] %v723, 128
        %772 = vxpose.xlu0.b32.cont [2/16] %v724, 128
        %773 = vxpose.xlu0.b32.cont [3/16] %v725, 128
        %774 = vxpose.xlu0.b32.cont [4/16] %v726, 128
        %775 = vxpose.xlu0.b32.cont [5/16] %v727, 128
        %776 = vxpose.xlu0.b32.cont [6/16] %v728, 128
        %777 = vxpose.xlu0.b32.cont [7/16] %v729, 128
        %778 = vxpose.xlu0.b32.cont [8/16] %v730, 128
        %779 = vxpose.xlu0.b32.cont [9/16] %v731, 128
        %780 = vxpose.xlu0.b32.cont [10/16] %v732, 128
        %781 = vxpose.xlu0.b32.cont [11/16] %v733, 128
        %782 = vxpose.xlu0.b32.cont [12/16] %v734, 128
        %783 = vxpose.xlu0.b32.cont [13/16] %v735, 128
        %784 = vxpose.xlu0.b32.cont [14/16] %v736, 128
        %785 = vxpose.xlu0.b32.cont [15/16] %v737, 128
        %786 = vxpose.xlu0.b32.end [16/16] %v738, 128
        %v787 = vpop.trf.xlu0
        %v788 = vpop.trf.xlu0
        %v789 = vpop.trf.xlu0
        %v790 = vpop.trf.xlu0
        %v791 = vpop.trf.xlu0
        %v792 = vpop.trf.xlu0
        %v793 = vpop.trf.xlu0
        %v794 = vpop.trf.xlu0
        %v795 = vpop.trf.xlu0
        %v796 = vpop.trf.xlu0
        %v797 = vpop.trf.xlu0
        %v798 = vpop.trf.xlu0
        %v799 = vpop.trf.xlu0
        %v800 = vpop.trf.xlu0
        %v801 = vpop.trf.xlu0
        %v802 = vpop.trf.xlu0
        %803 = vst [vmem:[%s3] sm:$0xff] %v755
        %804 = vst [vmem:[%s3 + $0x8] sm:$0xff] %v787
        %s805 = scalar_lea.vmem [#allocation2], 256
        %v806 = vld [vmem:[%s805] sm:$0xff]
        %v807 = vld [vmem:[%s805 + $0x8] sm:$0xff]
        %v808 = vld [vmem:[%s805 + $0x10] sm:$0xff]
        %v809 = vld [vmem:[%s805 + $0x18] sm:$0xff]
        %v810 = vld [vmem:[%s805 + $0x20] sm:$0xff]
        %v811 = vld [vmem:[%s805 + $0x28] sm:$0xff]
        %v812 = vld [vmem:[%s805 + $0x30] sm:$0xff]
        %v813 = vld [vmem:[%s805 + $0x38] sm:$0xff]
        %v814 = vld [vmem:[%s805 + $0x40] sm:$0xff]
        %v815 = vld [vmem:[%s805 + $0x48] sm:$0xff]
        %v816 = vld [vmem:[%s805 + $0x50] sm:$0xff]
        %v817 = vld [vmem:[%s805 + $0x58] sm:$0xff]
        %v818 = vld [vmem:[%s805 + $0x60] sm:$0xff]
        %v819 = vld [vmem:[%s805 + $0x68] sm:$0xff]
        %v820 = vld [vmem:[%s805 + $0x70] sm:$0xff]
        %v821 = vld [vmem:[%s805 + $0x78] sm:$0xff]
        %v822 = vld [vmem:[%s805 + $0x80] sm:$0xff]
        %v823 = vld [vmem:[%s805 + $0x88] sm:$0xff]
        %v824 = vld [vmem:[%s805 + $0x90] sm:$0xff]
        %v825 = vld [vmem:[%s805 + $0x98] sm:$0xff]
        %v826 = vld [vmem:[%s805 + $0xa0] sm:$0xff]
        %v827 = vld [vmem:[%s805 + $0xa8] sm:$0xff]
        %v828 = vld [vmem:[%s805 + $0xb0] sm:$0xff]
        %v829 = vld [vmem:[%s805 + $0xb8] sm:$0xff]
        %v830 = vld [vmem:[%s805 + $0xc0] sm:$0xff]
        %v831 = vld [vmem:[%s805 + $0xc8] sm:$0xff]
        %v832 = vld [vmem:[%s805 + $0xd0] sm:$0xff]
        %v833 = vld [vmem:[%s805 + $0xd8] sm:$0xff]
        %v834 = vld [vmem:[%s805 + $0xe0] sm:$0xff]
        %v835 = vld [vmem:[%s805 + $0xe8] sm:$0xff]
        %v836 = vld [vmem:[%s805 + $0xf0] sm:$0xff]
        %v837 = vld [vmem:[%s805 + $0xf8] sm:$0xff]
        %v838 = vmul.f32 %v806, %v638
        %v839 = vmul.f32 %v807, %v638
        %v840 = vmul.f32 %v808, %v638
        %v841 = vmul.f32 %v809, %v638
        %v842 = vmul.f32 %v810, %v638
        %v843 = vmul.f32 %v811, %v638
        %v844 = vmul.f32 %v812, %v638
        %v845 = vmul.f32 %v813, %v638
        %v846 = vmul.f32 %v814, %v638
        %v847 = vmul.f32 %v815, %v638
        %v848 = vmul.f32 %v816, %v638
        %v849 = vmul.f32 %v817, %v638
        %v850 = vmul.f32 %v818, %v638
        %v851 = vmul.f32 %v819, %v638
        %v852 = vmul.f32 %v820, %v638
        %v853 = vmul.f32 %v821, %v638
        %v854 = vmul.f32 %v822, %v638
        %v855 = vmul.f32 %v823, %v638
        %v856 = vmul.f32 %v824, %v638
        %v857 = vmul.f32 %v825, %v638
        %v858 = vmul.f32 %v826, %v638
        %v859 = vmul.f32 %v827, %v638
        %v860 = vmul.f32 %v828, %v638
        %v861 = vmul.f32 %v829, %v638
        %v862 = vmul.f32 %v830, %v638
        %v863 = vmul.f32 %v831, %v638
        %v864 = vmul.f32 %v832, %v638
        %v865 = vmul.f32 %v833, %v638
        %v866 = vmul.f32 %v834, %v638
        %v867 = vmul.f32 %v835, %v638
        %v868 = vmul.f32 %v836, %v638
        %v869 = vmul.f32 %v837, %v638
        %v870 = vadd.f32 %v838, %v674
        %v871 = vadd.f32 %v839, %v674
        %v872 = vadd.f32 %v840, %v674
        %v873 = vadd.f32 %v841, %v674
        %v874 = vadd.f32 %v842, %v674
        %v875 = vadd.f32 %v843, %v674
        %v876 = vadd.f32 %v844, %v674
        %v877 = vadd.f32 %v845, %v674
        %v878 = vadd.f32 %v846, %v674
        %v879 = vadd.f32 %v847, %v674
        %v880 = vadd.f32 %v848, %v674
        %v881 = vadd.f32 %v849, %v674
        %v882 = vadd.f32 %v850, %v674
        %v883 = vadd.f32 %v851, %v674
        %v884 = vadd.f32 %v852, %v674
        %v885 = vadd.f32 %v853, %v674
        %v886 = vadd.f32 %v854, %v674
        %v887 = vadd.f32 %v855, %v674
        %v888 = vadd.f32 %v856, %v674
        %v889 = vadd.f32 %v857, %v674
        %v890 = vadd.f32 %v858, %v674
        %v891 = vadd.f32 %v859, %v674
        %v892 = vadd.f32 %v860, %v674
        %v893 = vadd.f32 %v861, %v674
        %v894 = vadd.f32 %v862, %v674
        %v895 = vadd.f32 %v863, %v674
        %v896 = vadd.f32 %v864, %v674
        %v897 = vadd.f32 %v865, %v674
        %v898 = vadd.f32 %v866, %v674
        %v899 = vadd.f32 %v867, %v674
        %v900 = vadd.f32 %v868, %v674
        %v901 = vadd.f32 %v869, %v674
        %v902 = vmax.f32 %v870, 0.0
        %v903 = vmax.f32 %v871, 0.0
        %v904 = vmax.f32 %v872, 0.0
        %v905 = vmax.f32 %v873, 0.0
        %v906 = vmax.f32 %v874, 0.0
        %v907 = vmax.f32 %v875, 0.0
        %v908 = vmax.f32 %v876, 0.0
        %v909 = vmax.f32 %v877, 0.0
        %v910 = vmax.f32 %v878, 0.0
        %v911 = vmax.f32 %v879, 0.0
        %v912 = vmax.f32 %v880, 0.0
        %v913 = vmax.f32 %v881, 0.0
        %v914 = vmax.f32 %v882, 0.0
        %v915 = vmax.f32 %v883, 0.0
        %v916 = vmax.f32 %v884, 0.0
        %v917 = vmax.f32 %v885, 0.0
        %v918 = vmax.f32 %v886, 0.0
        %v919 = vmax.f32 %v887, 0.0
        %v920 = vmax.f32 %v888, 0.0
        %v921 = vmax.f32 %v889, 0.0
        %v922 = vmax.f32 %v890, 0.0
        %v923 = vmax.f32 %v891, 0.0
        %v924 = vmax.f32 %v892, 0.0
        %v925 = vmax.f32 %v893, 0.0
        %v926 = vmax.f32 %v894, 0.0
        %v927 = vmax.f32 %v895, 0.0
        %v928 = vmax.f32 %v896, 0.0
        %v929 = vmax.f32 %v897, 0.0
        %v930 = vmax.f32 %v898, 0.0
        %v931 = vmax.f32 %v899, 0.0
        %v932 = vmax.f32 %v900, 0.0
        %v933 = vmax.f32 %v901, 0.0
        %934 = vxpose.xlu0.b32.start [1/16] %v902, 128
        %935 = vxpose.xlu0.b32.cont [2/16] %v903, 128
        %936 = vxpose.xlu0.b32.cont [3/16] %v904, 128
        %937 = vxpose.xlu0.b32.cont [4/16] %v905, 128
        %938 = vxpose.xlu0.b32.cont [5/16] %v906, 128
        %939 = vxpose.xlu0.b32.cont [6/16] %v907, 128
        %940 = vxpose.xlu0.b32.cont [7/16] %v908, 128
        %941 = vxpose.xlu0.b32.cont [8/16] %v909, 128
        %942 = vxpose.xlu0.b32.cont [9/16] %v910, 128
        %943 = vxpose.xlu0.b32.cont [10/16] %v911, 128
        %944 = vxpose.xlu0.b32.cont [11/16] %v912, 128
        %945 = vxpose.xlu0.b32.cont [12/16] %v913, 128
        %946 = vxpose.xlu0.b32.cont [13/16] %v914, 128
        %947 = vxpose.xlu0.b32.cont [14/16] %v915, 128
        %948 = vxpose.xlu0.b32.cont [15/16] %v916, 128
        %949 = vxpose.xlu0.b32.end [16/16] %v917, 128
        %v950 = vpop.trf.xlu0
        %v951 = vpop.trf.xlu0
        %v952 = vpop.trf.xlu0
        %v953 = vpop.trf.xlu0
        %v954 = vpop.trf.xlu0
        %v955 = vpop.trf.xlu0
        %v956 = vpop.trf.xlu0
        %v957 = vpop.trf.xlu0
        %v958 = vpop.trf.xlu0
        %v959 = vpop.trf.xlu0
        %v960 = vpop.trf.xlu0
        %v961 = vpop.trf.xlu0
        %v962 = vpop.trf.xlu0
        %v963 = vpop.trf.xlu0
        %v964 = vpop.trf.xlu0
        %v965 = vpop.trf.xlu0
        %966 = vxpose.xlu0.b32.start [1/16] %v918, 128
        %967 = vxpose.xlu0.b32.cont [2/16] %v919, 128
        %968 = vxpose.xlu0.b32.cont [3/16] %v920, 128
        %969 = vxpose.xlu0.b32.cont [4/16] %v921, 128
        %970 = vxpose.xlu0.b32.cont [5/16] %v922, 128
        %971 = vxpose.xlu0.b32.cont [6/16] %v923, 128
        %972 = vxpose.xlu0.b32.cont [7/16] %v924, 128
        %973 = vxpose.xlu0.b32.cont [8/16] %v925, 128
        %974 = vxpose.xlu0.b32.cont [9/16] %v926, 128
        %975 = vxpose.xlu0.b32.cont [10/16] %v927, 128
        %976 = vxpose.xlu0.b32.cont [11/16] %v928, 128
        %977 = vxpose.xlu0.b32.cont [12/16] %v929, 128
        %978 = vxpose.xlu0.b32.cont [13/16] %v930, 128
        %979 = vxpose.xlu0.b32.cont [14/16] %v931, 128
        %980 = vxpose.xlu0.b32.cont [15/16] %v932, 128
        %981 = vxpose.xlu0.b32.end [16/16] %v933, 128
        %v982 = vpop.trf.xlu0
        %v983 = vpop.trf.xlu0
        %v984 = vpop.trf.xlu0
        %v985 = vpop.trf.xlu0
        %v986 = vpop.trf.xlu0
        %v987 = vpop.trf.xlu0
        %v988 = vpop.trf.xlu0
        %v989 = vpop.trf.xlu0
        %v990 = vpop.trf.xlu0
        %v991 = vpop.trf.xlu0
        %v992 = vpop.trf.xlu0
        %v993 = vpop.trf.xlu0
        %v994 = vpop.trf.xlu0
        %v995 = vpop.trf.xlu0
        %v996 = vpop.trf.xlu0
        %v997 = vpop.trf.xlu0
        %s998 = scalar_lea.vmem %s3, 16
        %999 = vst [vmem:[%s998] sm:$0xff] %v950
        %1000 = vst [vmem:[%s998 + $0x8] sm:$0xff] %v982
      $region40: #{conv_task_forward.1} parent=31 // pred_fallthru
        _
      // Predicated region
      $region41: #{conv_task_forward.1} parent=31 // pred_check
        %p1001 = pneg %p95
      $region42: #{conv_task_forward.1} parent=31 // pred_check_branch
        %1003 = sbr.rel (%p1001) target = $region44
      $region43: #{conv_task_forward.1} parent=31 // pred_region
        _
      $region44: #{conv_task_forward.1} parent=31 // pred_fallthru
        _
      // Predicated region
      $region45: #{conv_task_forward.1} parent=31 // pred_check
        %p1004 = pneg %p95
      $region46: #{conv_task_forward.1} parent=31 // pred_check_branch
        %1006 = sbr.rel (%p1004) target = $region48
      $region47: #{conv_task_forward.1} parent=31 // pred_region
        _
      $region48: #{conv_task_forward.1} parent=31 // pred_fallthru
        _
    $region32: #{conv_task_forward.1} parent=5 // pred_fallthru
      _
    %p1007 = scmp.le.s32.totalorder 2, %s9
    // Predicated region
    $region49: #{conv_task_forward.1} parent=5 // pred_check
      %p1008 = pneg %p1007
    $region50: #{conv_task_forward.1} parent=5 // pred_check_branch
      %1010 = sbr.rel (%p1008) target = $region52
    $region51: #{conv_task_forward.1} parent=5 // pred_region
      %s1011 = ssub.s32 %s9, 2
    $region52: #{conv_task_forward.1} parent=5 // pred_fallthru
      _
  $region6: #{conv_task_forward.1} parent=0 // loop_footer
    %s13 = sadd.s32 1, %s9
  $region7: #{conv_task_forward.1} parent=0 // loop_footer_branch
    %8 = sbr.rel target = $region3
  $region8: #{conv_task_forward.1} parent=0 // loop_exit
    _

</llo_original>
